<compile_context>
chip_gen: v7x
topology: tpu7x:2x2x1
jax: 0.10.0
libtpu: 0.0.40
codegen_flags: <defaults>
</compile_context>

<pallas_src>
import jax
import jax.numpy as jnp
from jax.experimental import pallas as pl
from jax.experimental.pallas import tpu as pltpu


def _round_up(x: int, m: int) -> int:
    return (x + m - 1) // m * m


def _vmem_plan():
    """Generation-aware VMEM numbers: (limit passed to Mosaic, tile budget).

    Physical VMEM is 128 MiB on v5e/v6e and 64 MiB on v7x; raise the scoped
    limit above the 16/32 MiB defaults but keep headroom for Mosaic scratch.
    Falls back to the v7x (smallest) capacity if the query is unavailable.
    """
    try:
        cap = int(pltpu.get_tpu_info().vmem_capacity_bytes)
    except Exception:
        cap = 64 * 1024 * 1024
    limit = min((3 * cap) // 4, 96 * 1024 * 1024)   # ~48 MiB on v7x, 96 MiB else
    budget = (17 * limit) // 20                     # plan tiles against ~85%
    return limit, budget


def _linear_kernel(x_ref, w_ref, b_ref, o_ref, acc_ref):
    """One (tb, tn) output tile of y = x @ W^T + b.

    Grid = (batch, N, K); K (the n_in reduction) is innermost/"arbitrary" and
    accumulates into an f32 VMEM scratch, so the output tile stays resident and
    is written back to HBM once per (i, j) tile.
    """
    k = pl.program_id(2)

    @pl.when(k == 0)
    def _():
        acc_ref[...] = jnp.zeros_like(acc_ref)

    acc_ref[...] += jnp.dot(x_ref[...], w_ref[...],
                            preferred_element_type=jnp.float32)

    @pl.when(k == pl.num_programs(2) - 1)
    def _():
        o_ref[...] = (acc_ref[...] + b_ref[...]).astype(o_ref.dtype)


class PallasLinear:
    """torch.nn.Linear forward (y = x @ W.T + b) backed by a Pallas TPU kernel.

    The transposed / padded weight and bias are prepared once here (hoisted out
    of the per-call hot path).  Wrap calls in jax.jit for production use.
    """

    def __init__(self, weight, bias, *, compute_dtype=None, tb_target=1024):
        n_out, n_in = weight.shape
        self.n_in, self.n_out = int(n_in), int(n_out)
        self.tb_target = int(tb_target)
        self.weight, self.bias = weight, bias                    # for fast path
        # Optional bf16 streaming (halves HBM bytes on the mem-bound path,
        # f32 accumulation preserved).  Default: keep the input dtype exactly.
        self.compute_dtype = jnp.dtype(compute_dtype) if compute_dtype is not None \
            else jnp.dtype(weight.dtype)

        # --- N tiling ---------------------------------------------------------
        if self.n_out < 128:
            # Keep n_out as the full (unpadded) last dim: masked stores write far
            # fewer HBM bytes than padding e.g. 3 -> 128 lanes of zeros.
            self.tn = self.n_out
            self.n_out_p = self.n_out
        else:
            # Lane-dense tiles: 256 matches the v6e/v7x 2x256^2 MXU when it does
            # not add padding, otherwise 128 (also the v5e-native width).
            self.tn = 256 if self.n_out % 256 == 0 else 128
            self.n_out_p = _round_up(self.n_out, self.tn)
        self.nn = self.n_out_p // self.tn

        # --- K tiling ---------------------------------------------------------
        if self.n_in <= 1024:
            self.tk = self.n_in
            self.n_in_p = self.n_in
        else:
            self.tk = 512                     # multiple of 8 and 128
            self.n_in_p = _round_up(self.n_in, self.tk)
        self.nk = self.n_in_p // self.tk

        # Resident operands (constant index_map) are single-buffered; tiled ones
        # keep the default double buffering.
        self.w_buffers = 1 if (self.nn == 1 and self.nk == 1) else 2
        self.b_buffers = 1 if self.nn == 1 else 2

        # --- pre-transposed / zero-padded parameters (done once) --------------
        w_t = jnp.zeros((self.n_in_p, self.n_out_p), dtype=self.compute_dtype)
        self.w_t = w_t.at[:self.n_in, :self.n_out].set(
            weight.T.astype(self.compute_dtype))
        b_p = jnp.zeros((1, self.n_out_p), dtype=jnp.float32)
        self.b_p = b_p.at[:, :self.n_out].set(bias.astype(jnp.float32)[None, :])

    def __call__(self, x, *, force_pallas=False):
        B, n_in = x.shape
        assert n_in == self.n_in, "input feature dim mismatch"

        # Tiny-problem fast path: grid/launch overhead and wrapper pad/slice make
        # Pallas strictly slower below ~1 MiB of streamed data.
        if not force_pallas and B * (self.n_in + self.n_out) * x.dtype.itemsize < (1 << 20):
            return (x @ self.weight.T.astype(x.dtype)
                    + self.bias.astype(x.dtype)).astype(x.dtype)

        vmem_limit, vmem_budget = _vmem_plan()
        x_item = self.compute_dtype.itemsize
        out_item = jnp.dtype(x.dtype).itemsize

        # VMEM accounting: W/bias buffers + (2x x-tile, 2x out-tile, f32 acc) per row.
        fixed = (self.w_buffers * self.tk * self.tn * x_item
                 + self.b_buffers * self.tn * 4)
        per_row = 2 * self.tk * x_item + 2 * self.tn * out_item + self.tn * 4
        tb_cap = max(8, ((vmem_budget - fixed) // per_row) // 8 * 8)
        tb = max(8, int(min(self.tb_target, _round_up(B, 8), tb_cap)))

        # Megacore: guarantee >=2 parallel grid steps (v7x has 2 TCs) when B allows.
        if self.nn == 1 and B >= 16 and tb >= B:
            tb = _round_up((B + 1) // 2, 8)

        B_p = _round_up(B, tb)

        xc = x.astype(self.compute_dtype)
        if B_p != B or self.n_in_p != n_in:
            xc = jnp.pad(xc, ((0, B_p - B), (0, self.n_in_p - n_in)))

        grid = (B_p // tb, self.nn, self.nk)
        cost = pl.CostEstimate(
            flops=2 * B_p * self.n_in_p * self.n_out_p,
            transcendentals=0,
            bytes_accessed=(B_p * self.n_in_p * x_item
                            + grid[0] * self.n_in_p * self.n_out_p * x_item
                            + B_p * self.n_out_p * out_item),
        )

        y_p = pl.pallas_call(
            _linear_kernel,
            out_shape=jax.ShapeDtypeStruct((B_p, self.n_out_p), x.dtype),
            grid_spec=pltpu.PrefetchScalarGridSpec(
                num_scalar_prefetch=0,
                grid=grid,
                in_specs=[
                    # x: (tb, tk), tiled over batch and K
                    pl.BlockSpec((tb, self.tk), lambda i, j, k: (i, k)),
                    # W^T: (tk, tn); single-buffered when fully resident
                    pl.BlockSpec((self.tk, self.tn), lambda i, j, k: (k, j),
                                 pipeline_mode=pl.Buffered(self.w_buffers)),
                    # bias: (1, tn)
                    pl.BlockSpec((1, self.tn), lambda i, j, k: (0, j),
                                 pipeline_mode=pl.Buffered(self.b_buffers)),
                ],
                out_specs=pl.BlockSpec((tb, self.tn), lambda i, j, k: (i, j)),
                scratch_shapes=[pltpu.VMEM((tb, self.tn), jnp.float32)],
            ),
            compiler_params=pltpu.CompilerParams(
                dimension_semantics=("parallel", "parallel", "arbitrary"),
                vmem_limit_bytes=vmem_limit,
            ),
            cost_estimate=cost,
        )(xc, self.w_t, self.b_p)

        # Strip batch / N padding back to the logical output shape.
        return y_p[:B, :self.n_out]


def logistic_regression_forward(x, weight, bias, **kwargs):
    """Functional convenience wrapper (prefer caching PallasLinear at init)."""
    return PallasLinear(weight, bias)(x, **kwargs)


if __name__ == "__main__":
    key = jax.random.PRNGKey(0)

    # --- shapes implied by the module: x = torch.randn(10, 5), Linear(5, 3) ---
    batch, n_inputs, n_outputs = 10, 5, 3
    x = jax.random.normal(key, (batch, n_inputs), dtype=jnp.float32)
    weight = jnp.full((n_outputs, n_inputs), 0.01, dtype=jnp.float32)   # fill_(0.01)
    bias = jnp.full((n_outputs,), 0.01, dtype=jnp.float32)              # fill_(0.01)

    model = PallasLinear(weight, bias)
    # force_pallas so the kernel path (not the tiny-problem XLA fast path) runs.
    y = model(x, force_pallas=True)
    jax.block_until_ready(y)
    y_ref = x @ weight.T + bias
    assert y.shape == y_ref.shape, "shape mismatch vs reference"
    assert jnp.allclose(y, y_ref, atol=1e-5), "mismatch vs reference (tiny case)"

    # --- larger cases: exercise N tiling and the K-accumulation path ----------
    kx, kw, kb = jax.random.split(key, 3)
    for (B, ni, no) in [(256, 512, 384),    # multi N-tile, single K stripe
                        (64, 1536, 96)]:    # unpadded small n_out, 3 K tiles
        xb = jax.random.normal(kx, (B, ni), dtype=jnp.float32)
        wb = jax.random.normal(kw, (no, ni), dtype=jnp.float32) * 0.02
        bb = jax.random.normal(kb, (no,), dtype=jnp.float32)
        yb = PallasLinear(wb, bb)(xb, force_pallas=True)
        jax.block_until_ready(yb)
        rb = xb @ wb.T + bb
        assert yb.shape == rb.shape, f"shape mismatch at {(B, ni, no)}"
        assert jnp.allclose(yb, rb, atol=1e-2, rtol=1e-2), f"mismatch at {(B, ni, no)}"

    print("KERNEL_OK")
</pallas_src>

<mosaic_0001>
module attributes {stable_mosaic.version = 11 : i64} {
  func.func @_linear_kernel(%arg0: i32, %arg1: i32, %arg2: i32, %arg3: memref<16x5xf32, #tpu.memory_space<vmem>>, %arg4: memref<5x3xf32, #tpu.memory_space<vmem>>, %arg5: memref<1x3xf32, #tpu.memory_space<vmem>>, %arg6: memref<16x3xf32, #tpu.memory_space<vmem>>, %arg7: memref<16x3xf32, #tpu.memory_space<vmem>>) attributes {dimension_semantics = [#tpu.dimension_semantics<parallel>, #tpu.dimension_semantics<parallel>, #tpu.dimension_semantics<arbitrary>], iteration_bounds = array<i64: 1, 1, 1>, scalar_prefetch = 0 : i64, scratch_operands = 1 : i64, tpu.core_type = #tpu.core_type<tc>, window_params = [{transform_indices = @transform_0, window_bounds = array<i64: 16, 5>}, {pipeline_mode = #tpu.pipeline_mode<synchronous>, transform_indices = @transform_1, window_bounds = array<i64: 5, 3>}, {pipeline_mode = #tpu.pipeline_mode<synchronous>, transform_indices = @transform_2, window_bounds = array<i64: 1, 3>}, {transform_indices = @transform_3, window_bounds = array<i64: 16, 3>}]} {
    %c0_i32 = arith.constant 0 : i32
    %0 = arith.cmpi eq, %arg2, %c0_i32 : i32
    %1 = arith.extui %0 : i1 to i32
    %c0_i32_0 = arith.constant 0 : i32
    %2 = arith.cmpi ne, %1, %c0_i32_0 : i32
    scf.if %2 {
      %cst_10 = arith.constant 0.000000e+00 : f32
      %12 = vector.broadcast %cst_10 : f32 to vector<16x3xf32>
      %c0_11 = arith.constant 0 : index
      %c0_12 = arith.constant 0 : index
      %13 = vector.load %arg7[%c0_11, %c0_12] : memref<16x3xf32, #tpu.memory_space<vmem>>, vector<16x3xf32>
      tpu.vector_store %arg7[%c0_11, %c0_12], %12 {strides = array<i32>} : memref<16x3xf32, #tpu.memory_space<vmem>>, vector<16x3xf32>,
    } else {
    }
    %c0 = arith.constant 0 : index
    %c0_1 = arith.constant 0 : index
    %3 = vector.load %arg7[%c0, %c0_1] : memref<16x3xf32, #tpu.memory_space<vmem>>, vector<16x3xf32>
    %c0_2 = arith.constant 0 : index
    %c0_3 = arith.constant 0 : index
    %4 = vector.load %arg3[%c0_2, %c0_3] : memref<16x5xf32, #tpu.memory_space<vmem>>, vector<16x5xf32>
    %c0_4 = arith.constant 0 : index
    %c0_5 = arith.constant 0 : index
    %5 = vector.load %arg4[%c0_4, %c0_5] : memref<5x3xf32, #tpu.memory_space<vmem>>, vector<5x3xf32>
    %cst = arith.constant dense<0.000000e+00> : vector<16x3xf32>
    %6 = tpu.matmul %4, %5, %cst {dimension_numbers = #tpu.dot_dimension_numbers<[1], [0], [0], [1], [0, 0, 1, 1], [], []>} : vector<16x5xf32>, vector<5x3xf32>, vector<16x3xf32> -> vector<16x3xf32>
    %7 = arith.addf %3, %6 : vector<16x3xf32>
    %c0_6 = arith.constant 0 : index
    %c0_7 = arith.constant 0 : index
    %8 = vector.load %arg7[%c0_6, %c0_7] : memref<16x3xf32, #tpu.memory_space<vmem>>, vector<16x3xf32>
    tpu.vector_store %arg7[%c0_6, %c0_7], %7 {strides = array<i32>} : memref<16x3xf32, #tpu.memory_space<vmem>>, vector<16x3xf32>,
    %c0_i32_8 = arith.constant 0 : i32
    %9 = arith.cmpi eq, %arg2, %c0_i32_8 : i32
    %10 = arith.extui %9 : i1 to i32
    %c0_i32_9 = arith.constant 0 : i32
    %11 = arith.cmpi ne, %10, %c0_i32_9 : i32
    scf.if %11 {
      %c0_10 = arith.constant 0 : index
      %c0_11 = arith.constant 0 : index
      %12 = vector.load %arg7[%c0_10, %c0_11] : memref<16x3xf32, #tpu.memory_space<vmem>>, vector<16x3xf32>
      %c0_12 = arith.constant 0 : index
      %c0_13 = arith.constant 0 : index
      %13 = vector.load %arg5[%c0_12, %c0_13] : memref<1x3xf32, #tpu.memory_space<vmem>>, vector<1x3xf32>
      %14 = vector.broadcast %13 : vector<1x3xf32> to vector<16x3xf32>
      %15 = arith.addf %12, %14 : vector<16x3xf32>
      %c0_14 = arith.constant 0 : index
      %c0_15 = arith.constant 0 : index
      %16 = vector.load %arg6[%c0_14, %c0_15] : memref<16x3xf32, #tpu.memory_space<vmem>>, vector<16x3xf32>
      tpu.vector_store %arg6[%c0_14, %c0_15], %15 {strides = array<i32>} : memref<16x3xf32, #tpu.memory_space<vmem>>, vector<16x3xf32>,
    } else {
    }
    return
  }
  func.func @transform_0(%arg0: i32, %arg1: i32, %arg2: i32) -> (i32, i32) {
    %c0_i32 = arith.constant 0 : i32
    return %arg0, %arg2 : i32, i32
  }
  func.func @transform_1(%arg0: i32, %arg1: i32, %arg2: i32) -> (i32, i32) {
    %c0_i32 = arith.constant 0 : i32
    return %arg2, %arg1 : i32, i32
  }
  func.func @transform_2(%arg0: i32, %arg1: i32, %arg2: i32) -> (i32, i32) {
    %c0_i32 = arith.constant 0 : i32
    %c0_i32_0 = arith.constant 0 : i32
    return %c0_i32, %arg1 : i32, i32
  }
  func.func @transform_3(%arg0: i32, %arg1: i32, %arg2: i32) -> (i32, i32) {
    %c0_i32 = arith.constant 0 : i32
    return %arg0, %arg1 : i32, i32
  }
}

</mosaic_0001>

<llo_original>
// kernel: tpu_custom_call.1
$region0: #{tpu_custom_call.1}
  #allocation0 [shape = 'u32[]', space=smem, size = 0x4, offset = 0x4, fixed_abs, tag = 'smem constant byte address 0x4 - core index']
  #allocation1 [shape = 'u32[144,128]{1,0:T(1,128)}', space=vmem, size = 0x12000, scoped, tag = 'internal scratch']
  #allocation2 [shape = 'f32[16,3]{1,0:T(8,128)}', space=vmem, size = 0x2000, scoped, tag = 'scratch operand']
  %s0 = inlined_call_operand.vmem [shape: f32[16,5], index: 0, kind: input, shape index: {}]
  %s1 = inlined_call_operand.vmem [shape: f32[5,3], index: 1, kind: input, shape index: {}]
  %s2 = inlined_call_operand.vmem [shape: f32[1,3], index: 2, kind: input, shape index: {}]
  %s3 = inlined_call_operand.vmem [shape: f32[16,3], index: 3, kind: output, shape index: {}]
  %s4 = sld [smem:[#allocation0]]
  $region30: #{tpu_custom_call.1} parent=0
    _
  %s6 = ssub.s32 1, %s4
  %s7 = scalar_select 0, %s6, %s4
  // Predicated region
  $region2: #{tpu_custom_call.1} parent=0 // pred_check
    _
  $region3: #{tpu_custom_call.1} parent=0 // pred_check_branch
    %9 = sbr.rel (0) target = $region5
  $region4: #{tpu_custom_call.1} parent=0 // pred_region
    _
  $region5: #{tpu_custom_call.1} parent=0 // pred_fallthru
    _
  // Predicated region
  $region6: #{tpu_custom_call.1} parent=0 // pred_check
    _
  $region7: #{tpu_custom_call.1} parent=0 // pred_check_branch
    %11 = sbr.rel (0) target = $region9
  $region8: #{tpu_custom_call.1} parent=0 // pred_region
    _
  $region9: #{tpu_custom_call.1} parent=0 // pred_fallthru
    _
  // Predicated region
  $region10: #{tpu_custom_call.1} parent=0 // pred_check
    _
  $region11: #{tpu_custom_call.1} parent=0 // pred_check_branch
    %13 = sbr.rel (0) target = $region13
  $region12: #{tpu_custom_call.1} parent=0 // pred_region
    _
  $region13: #{tpu_custom_call.1} parent=0 // pred_fallthru
    _
  %p14 = scmp.eq.s32.totalorder 0, 0
  // Predicated region
  $region14: #{tpu_custom_call.1} parent=0 // pred_check
    %p15 = pneg %p14
  $region15: #{tpu_custom_call.1} parent=0 // pred_check_branch
    %17 = sbr.rel (%p15) target = $region17
  $region16: #{tpu_custom_call.1} parent=0 // pred_region
    %vm18 = vcmask 23552
    %19 = vst.msk [vmem:[#allocation2] sm:$0xff] %vm18, 0.0
    %20 = vst.msk [vmem:[#allocation2 + $0x8] sm:$0xff] %vm18, 0.0
  $region17: #{tpu_custom_call.1} parent=0 // pred_fallthru
    _
  %v21 = vld [vmem:[#allocation2] sm:$0xff]
  %v22 = vld [vmem:[#allocation2 + $0x8] sm:$0xff]
  %v23 = vld [vmem:[%s0] sm:$0xff]
  %v24 = vld [vmem:[%s0 + $0x8] sm:$0xff]
  %v25 = vld [vmem:[%s1] sm:$0x1f]
  %vm26 = vcmask 39936
  %v28 = vsel %vm26, %v23, 0
  %v31 = vsel %vm26, %v24, 0
  %vm33 = vcmask 1044480
  %v35 = vsel %vm33, %v25, 0
  %37 = vmatprep.subr.mxu0 0.0
  %38 = vmatpush1.msra.mxu0 %v35
  %39 = vmatprep.subr.mxu0 0.0
  %40 = vmatpush1.msra.mxu0 0.0
  %41 = vmatprep.subr.mxu0 0.0
  %42 = vmatpush1.msra.mxu0 0.0
  %43 = vmatprep.subr.mxu0 0.0
  %44 = vmatpush1.msra.mxu0 0.0
  %45 = vmatprep.subr.mxu0 0.0
  %46 = vmatpush1.msra.mxu0 0.0
  %47 = vmatprep.subr.mxu0 0.0
  %48 = vmatpush1.msra.mxu0 0.0
  %49 = vmatprep.subr.mxu0 0.0
  %50 = vmatpush1.msra.mxu0 0.0
  %51 = vmatprep.subr.mxu0 0.0
  %52 = vmatpush1.msra.mxu0 0.0
  %53 = vmatprep.subr.mxu0 0.0
  %54 = vmatpush1.msra.mxu0 0.0
  %55 = vmatprep.subr.mxu0 0.0
  %56 = vmatpush1.msra.mxu0 0.0
  %57 = vmatprep.subr.mxu0 0.0
  %58 = vmatpush1.msra.mxu0 0.0
  %59 = vmatprep.subr.mxu0 0.0
  %60 = vmatpush1.msra.mxu0 0.0
  %61 = vmatprep.subr.mxu0 0.0
  %62 = vmatpush1.msra.mxu0 0.0
  %63 = vmatprep.subr.mxu0 0.0
  %64 = vmatpush1.msra.mxu0 0.0
  %65 = vmatprep.subr.mxu0 0.0
  %66 = vmatpush1.msra.mxu0 0.0
  %67 = vmatprep.subr.mxu0 0.0
  %68 = vmatpush1.msra.mxu0 0.0
  %69 = vmatprep.subr.mxu0 0.0
  %70 = vmatpush1.msra.mxu0 0.0
  %71 = vmatprep.subr.mxu0 0.0
  %72 = vmatpush1.msra.mxu0 0.0
  %73 = vmatprep.subr.mxu0 0.0
  %74 = vmatpush1.msra.mxu0 0.0
  %75 = vmatprep.subr.mxu0 0.0
  %76 = vmatpush1.msra.mxu0 0.0
  %77 = vmatprep.subr.mxu0 0.0
  %78 = vmatpush1.msra.mxu0 0.0
  %79 = vmatprep.subr.mxu0 0.0
  %80 = vmatpush1.msra.mxu0 0.0
  %81 = vmatprep.subr.mxu0 0.0
  %82 = vmatpush1.msra.mxu0 0.0
  %83 = vmatprep.subr.mxu0 0.0
  %84 = vmatpush1.msra.mxu0 0.0
  %85 = vmatprep.subr.mxu0 0.0
  %86 = vmatpush1.msra.mxu0 0.0
  %87 = vmatprep.subr.mxu0 0.0
  %88 = vmatpush1.msra.mxu0 0.0
  %89 = vmatprep.subr.mxu0 0.0
  %90 = vmatpush1.msra.mxu0 0.0
  %91 = vmatprep.subr.mxu0 0.0
  %92 = vmatpush1.msra.mxu0 0.0
  %93 = vmatprep.subr.mxu0 0.0
  %94 = vmatpush1.msra.mxu0 0.0
  %95 = vmatprep.subr.mxu0 0.0
  %96 = vmatpush1.msra.mxu0 0.0
  %97 = vmatprep.subr.mxu0 0.0
  %98 = vmatpush1.msra.mxu0 0.0
  %99 = vmatprep.subr.mxu0 0.0
  %100 = vmatpush1.msra.mxu0 0.0
  %101 = vmatprep.mubr.f32.mxu0 0.0
  %102 = vmatmul.mubr.f32.gmra.mrb[0].mxu0 %v28
  %v103 = vpop.f32.mrb[0].mxu0
  %v104 = vadd.f32 0.0, %v103
  %v105 = vpop.f32.mrb[0].mxu0
  %106 = vmatprep.mubr.f32.mxu0 0.0
  %107 = vmatmul.mubr.f32.gmra.mrb[0].mxu0 %v31
  %v108 = vpop.f32.mrb[0].mxu0
  %v109 = vadd.f32 0.0, %v108
  %v110 = vpop.f32.mrb[0].mxu0
  %111 = vdwg.mxu0
  %v112 = vadd.f32 %v21, %v104
  %v113 = vadd.f32 %v22, %v109
  %vm114 = vcmask 23552
  %115 = vst.msk [vmem:[#allocation2] sm:$0xff] %vm114, %v112
  %116 = vst.msk [vmem:[#allocation2 + $0x8] sm:$0xff] %vm114, %v113
  // Predicated region
  $region18: #{tpu_custom_call.1} parent=0 // pred_check
    %p117 = pneg %p14
  $region19: #{tpu_custom_call.1} parent=0 // pred_check_branch
    %119 = sbr.rel (%p117) target = $region21
  $region20: #{tpu_custom_call.1} parent=0 // pred_region
    %v120 = vld [vmem:[#allocation2] sm:$0xff]
    %v121 = vld [vmem:[#allocation2 + $0x8] sm:$0xff]
    %v122 = vld [vmem:[%s2] sm:$0x1]
    %v124 = vlaneseq
    %v125 = vshrl.u32 %v124, 7
    %v126 = vsub.s32 0, %v125
    %v127 = vrot.slane %v122, %v126
    %v129 = vadd.f32 %v120, %v127
    %v130 = vadd.f32 %v121, %v127
    %131 = vst.msk [vmem:[%s3] sm:$0xff] %vm114, %v129
    %132 = vst.msk [vmem:[%s3 + $0x8] sm:$0xff] %vm114, %v130
  $region21: #{tpu_custom_call.1} parent=0 // pred_fallthru
    _
  // Predicated region
  $region22: #{tpu_custom_call.1} parent=0 // pred_check
    _
  $region23: #{tpu_custom_call.1} parent=0 // pred_check_branch
    %134 = sbr.rel (0) target = $region25
  $region24: #{tpu_custom_call.1} parent=0 // pred_region
    _
  $region25: #{tpu_custom_call.1} parent=0 // pred_fallthru
    _
  // Predicated region
  $region26: #{tpu_custom_call.1} parent=0 // pred_check
    _
  $region27: #{tpu_custom_call.1} parent=0 // pred_check_branch
    %136 = sbr.rel (0) target = $region29
  $region28: #{tpu_custom_call.1} parent=0 // pred_region
    _
  $region29: #{tpu_custom_call.1} parent=0 // pred_fallthru
    _

</llo_original>
